<compile_context>
chip_gen: v7x
topology: tpu7x:2x2x1
jax: 0.10.0
libtpu: 0.0.40
codegen_flags: <defaults>
</compile_context>

<pallas_src>
import functools

import jax
import jax.numpy as jnp
from jax.experimental import pallas as pl
from jax.experimental.pallas import tpu as pltpu


def _conv3x3_relu_kernel(x_ref, w_ref, b_ref, out_ref, col_ref, *, H, W, C):
    """One batch image per grid step.

    x_ref:   (C, H*W)    flattened NCHW feature map (batch dim squeezed)
    w_ref:   (C, 9*C)    w_flat[co, (ky*3+kx)*C + ci] = w[co, ci, ky, kx]
    b_ref:   (C, 1)
    out_ref: (C, H*W)
    col_ref: (9*C, H*W)  VMEM im2col scratch
    """
    HW = H * W

    # Column (x) position of every flattened spatial index, for edge masking.
    pcol = jax.lax.broadcasted_iota(jnp.int32, (1, HW), 1) % W

    # Build im2col: col[t*C + ci, y*W + x] = x[ci, y+dy, x+dx]  (0 outside),
    # with t = (dy+1)*3 + (dx+1) and flat shift q = dy*W + dx.  Row wrap-around
    # of the flat shift lands exactly on the column-invalid positions, which
    # the dx-mask zeroes; flat positions outside [0, HW) are zero-filled.
    for dy in (-1, 0, 1):
        for dx in (-1, 0, 1):
            t = (dy + 1) * 3 + (dx + 1)
            q = dy * W + dx
            dst_lo = max(0, -q)
            dst_hi = min(HW, HW - q)
            rows = slice(t * C, (t + 1) * C)

            src = x_ref[:, dst_lo + q:dst_hi + q]            # static lane slice
            if dx != 0:
                valid = ((pcol[:, dst_lo:dst_hi] + dx >= 0) &
                         (pcol[:, dst_lo:dst_hi] + dx < W))
                src = jnp.where(valid, src, 0.0)

            if dst_lo > 0:                                    # top halo rows
                col_ref[rows, 0:dst_lo] = jnp.zeros((C, dst_lo), jnp.float32)
            if dst_hi < HW:                                   # bottom halo rows
                col_ref[rows, dst_hi:HW] = jnp.zeros((C, HW - dst_hi),
                                                     jnp.float32)
            col_ref[rows, dst_lo:dst_hi] = src

    # Single MXU matmul (K = 9*C), fused bias + ReLU, lane-dense store.
    out = jnp.dot(w_ref[...], col_ref[...], preferred_element_type=jnp.float32)
    out_ref[...] = jnp.maximum(out + b_ref[...], 0.0).astype(out_ref.dtype)


def conv3x3_relu_pallas(x_nchw, w_oihw, b):
    """relu(conv2d(x, w, b, stride=1, padding=1)) for one NCHW feature map."""
    N, C, H, W = x_nchw.shape
    Cout, Cin, KH, KW = w_oihw.shape
    assert (Cout, Cin, KH, KW) == (C, C, 3, 3)
    HW = H * W

    x_flat = x_nchw.reshape(N, C, HW)                        # free (contiguous)
    # (O, I, 3, 3) -> (O, ky, kx, I) -> (O, 9*I): tap-major, channel-minor,
    # matching the im2col row ordering in the kernel.
    w_flat = jnp.transpose(w_oihw, (0, 2, 3, 1)).reshape(C, 9 * C)
    b2 = b.reshape(C, 1)

    kernel = functools.partial(_conv3x3_relu_kernel, H=H, W=W, C=C)

    out_flat = pl.pallas_call(
        kernel,
        out_shape=jax.ShapeDtypeStruct((N, C, HW), jnp.float32),
        grid_spec=pltpu.PrefetchScalarGridSpec(
            num_scalar_prefetch=0,
            grid=(N,),
            in_specs=[
                pl.BlockSpec((pl.Squeezed(), C, HW), lambda n: (n, 0, 0)),
                pl.BlockSpec((C, 9 * C), lambda n: (0, 0)),
                pl.BlockSpec((C, 1), lambda n: (0, 0)),
            ],
            out_specs=pl.BlockSpec((pl.Squeezed(), C, HW),
                                   lambda n: (n, 0, 0)),
            scratch_shapes=[pltpu.VMEM((9 * C, HW), jnp.float32)],
        ),
        compiler_params=pltpu.CompilerParams(
            dimension_semantics=("parallel",),
            vmem_limit_bytes=32 * 1024 * 1024),
    )(x_flat, w_flat, b2)

    return out_flat.reshape(N, C, H, W)                      # free (contiguous)


def rpn_head_feature_single_conv_forward(features, w_oihw, b):
    """RPNHeadFeatureSingleConv.forward: same conv + relu on each level."""
    assert isinstance(features, (list, tuple))
    return [conv3x3_relu_pallas(z, w_oihw, b) for z in features]


def _reference(x_nchw, w_oihw, b):
    """Pure-JAX reference (lax.conv) for the correctness check."""
    y = jax.lax.conv_general_dilated(
        x_nchw, w_oihw, window_strides=(1, 1), padding=((1, 1), (1, 1)),
        dimension_numbers=("NCHW", "OIHW", "NCHW"))
    return jnp.maximum(y + b[None, :, None, None], 0.0)


if __name__ == "__main__":
    # Small shapes consistent with the module: batch=2, channels=16, two
    # feature levels (16x16 and 8x8), 3x3 conv with in_channels == out_channels.
    N, C = 2, 16
    key = jax.random.PRNGKey(0)
    k1, k2, k3 = jax.random.split(key, 3)

    # Parameter init matching the module: normal_(std=0.01) weight, zero bias.
    w = 0.01 * jax.random.normal(k2, (C, C, 3, 3), dtype=jnp.float32)
    b = jnp.zeros((C,), dtype=jnp.float32)

    features = [
        jax.random.normal(k1, (N, C, 16, 16), dtype=jnp.float32),
        jax.random.normal(k3, (N, C, 8, 8), dtype=jnp.float32),
    ]

    outs = jax.block_until_ready(
        rpn_head_feature_single_conv_forward(features, w, b))

    for z, o in zip(features, outs):
        ref = _reference(z, w, b)
        assert o.shape == z.shape
        assert jnp.allclose(o, ref, atol=1e-5, rtol=1e-5)

    print("KERNEL_OK")
</pallas_src>

<mosaic_0001>
module attributes {stable_mosaic.version = 11 : i64} {
  func.func @_conv3x3_relu_kernel(%arg0: i32, %arg1: memref<1x16x256xf32, #tpu.memory_space<vmem>>, %arg2: memref<16x144xf32, #tpu.memory_space<vmem>>, %arg3: memref<16x1xf32, #tpu.memory_space<vmem>>, %arg4: memref<1x16x256xf32, #tpu.memory_space<vmem>>, %arg5: memref<144x256xf32, #tpu.memory_space<vmem>>) attributes {dimension_semantics = [#tpu.dimension_semantics<parallel>], iteration_bounds = array<i64: 2>, scalar_prefetch = 0 : i64, scratch_operands = 1 : i64, tpu.core_type = #tpu.core_type<tc>, window_params = [{transform_indices = @transform_0, window_bounds = array<i64: 1, 16, 256>}, {pipeline_mode = #tpu.pipeline_mode<synchronous>, transform_indices = @transform_1, window_bounds = array<i64: 16, 144>}, {pipeline_mode = #tpu.pipeline_mode<synchronous>, transform_indices = @transform_2, window_bounds = array<i64: 16, 1>}, {transform_indices = @transform_3, window_bounds = array<i64: 1, 16, 256>}]} {
    %0 = tpu.iota {dimensions = array<i32: 1>} : vector<1x256xi32>
    %c16_i32 = arith.constant 16 : i32
    %c0_i32 = arith.constant 0 : i32
    %1 = arith.cmpi eq, %c16_i32, %c0_i32 : i32
    %c1_i32 = arith.constant 1 : i32
    %2 = arith.select %1, %c1_i32, %c16_i32 : i32
    %3 = vector.broadcast %2 : i32 to vector<1x256xi32>
    %4 = arith.remsi %0, %3 : vector<1x256xi32>
    %c0_i32_0 = arith.constant 0 : i32
    %5 = vector.broadcast %c0_i32_0 : i32 to vector<1x256xi32>
    %6 = arith.cmpi ne, %4, %5 : vector<1x256xi32>
    %c0_i32_1 = arith.constant 0 : i32
    %7 = vector.broadcast %c0_i32_1 : i32 to vector<1x256xi32>
    %8 = arith.cmpi slt, %4, %7 : vector<1x256xi32>
    %c0_i32_2 = arith.constant 0 : i32
    %9 = arith.cmpi slt, %2, %c0_i32_2 : i32
    %10 = vector.broadcast %9 : i1 to vector<1x256xi1>
    %11 = vector.broadcast %10 : vector<1x256xi1> to vector<1x256xi1>
    %12 = arith.xori %8, %11 : vector<1x256xi1>
    %13 = arith.andi %12, %6 : vector<1x256xi1>
    %14 = vector.broadcast %2 : i32 to vector<1x256xi32>
    %15 = arith.addi %4, %14 : vector<1x256xi32>
    %16 = arith.select %13, %15, %4 : vector<1x256xi1>, vector<1x256xi32>
    %c0 = arith.constant 0 : index
    %c0_3 = arith.constant 0 : index
    %c0_4 = arith.constant 0 : index
    %17 = vector.load %arg1[%c0, %c0_3, %c0_4] : memref<1x16x256xf32, #tpu.memory_space<vmem>>, vector<1x16x239xf32>
    %18 = vector.shape_cast %17 : vector<1x16x239xf32> to vector<16x239xf32>
    %19 = vector.extract_strided_slice %16 {offsets = [0, 17], sizes = [1, 239], strides = [1, 1]} : vector<1x256xi32> to vector<1x239xi32>
    %c-1_i32 = arith.constant -1 : i32
    %20 = vector.broadcast %c-1_i32 : i32 to vector<1x239xi32>
    %21 = arith.addi %19, %20 : vector<1x239xi32>
    %c0_i32_5 = arith.constant 0 : i32
    %22 = vector.broadcast %c0_i32_5 : i32 to vector<1x239xi32>
    %23 = arith.cmpi sge, %21, %22 : vector<1x239xi32>
    %24 = vector.extract_strided_slice %16 {offsets = [0, 17], sizes = [1, 239], strides = [1, 1]} : vector<1x256xi32> to vector<1x239xi32>
    %c-1_i32_6 = arith.constant -1 : i32
    %25 = vector.broadcast %c-1_i32_6 : i32 to vector<1x239xi32>
    %26 = arith.addi %24, %25 : vector<1x239xi32>
    %c16_i32_7 = arith.constant 16 : i32
    %27 = vector.broadcast %c16_i32_7 : i32 to vector<1x239xi32>
    %28 = arith.cmpi slt, %26, %27 : vector<1x239xi32>
    %29 = arith.andi %23, %28 : vector<1x239xi1>
    %cst = arith.constant 0.000000e+00 : f32
    %30 = vector.shape_cast %29 : vector<1x239xi1> to vector<1x239xi1>
    %31 = vector.broadcast %30 : vector<1x239xi1> to vector<16x239xi1>
    %32 = vector.broadcast %cst : f32 to vector<16x239xf32>
    %33 = arith.select %31, %18, %32 : vector<16x239xi1>, vector<16x239xf32>
    %cst_8 = arith.constant 0.000000e+00 : f32
    %34 = vector.broadcast %cst_8 : f32 to vector<16x17xf32>
    %c0_9 = arith.constant 0 : index
    %c0_10 = arith.constant 0 : index
    %35 = vector.load %arg5[%c0_9, %c0_10] : memref<144x256xf32, #tpu.memory_space<vmem>>, vector<16x17xf32>
    tpu.vector_store %arg5[%c0_9, %c0_10], %34 {strides = array<i32>} : memref<144x256xf32, #tpu.memory_space<vmem>>, vector<16x17xf32>,
    %c0_11 = arith.constant 0 : index
    %c17 = arith.constant 17 : index
    %36 = vector.load %arg5[%c0_11, %c17] : memref<144x256xf32, #tpu.memory_space<vmem>>, vector<16x239xf32>
    tpu.vector_store %arg5[%c0_11, %c17], %33 {strides = array<i32>} : memref<144x256xf32, #tpu.memory_space<vmem>>, vector<16x239xf32>,
    %c0_12 = arith.constant 0 : index
    %c0_13 = arith.constant 0 : index
    %c0_14 = arith.constant 0 : index
    %37 = vector.load %arg1[%c0_12, %c0_13, %c0_14] : memref<1x16x256xf32, #tpu.memory_space<vmem>>, vector<1x16x240xf32>
    %38 = vector.shape_cast %37 : vector<1x16x240xf32> to vector<16x240xf32>
    %cst_15 = arith.constant 0.000000e+00 : f32
    %39 = vector.broadcast %cst_15 : f32 to vector<16x16xf32>
    %c16 = arith.constant 16 : index
    %c0_16 = arith.constant 0 : index
    %40 = vector.load %arg5[%c16, %c0_16] : memref<144x256xf32, #tpu.memory_space<vmem>>, vector<16x16xf32>
    tpu.vector_store %arg5[%c16, %c0_16], %39 {strides = array<i32>} : memref<144x256xf32, #tpu.memory_space<vmem>>, vector<16x16xf32>,
    %c16_17 = arith.constant 16 : index
    %c16_18 = arith.constant 16 : index
    %41 = vector.load %arg5[%c16_17, %c16_18] : memref<144x256xf32, #tpu.memory_space<vmem>>, vector<16x240xf32>
    tpu.vector_store %arg5[%c16_17, %c16_18], %38 {strides = array<i32>} : memref<144x256xf32, #tpu.memory_space<vmem>>, vector<16x240xf32>,
    %c0_19 = arith.constant 0 : index
    %c0_20 = arith.constant 0 : index
    %c0_21 = arith.constant 0 : index
    %42 = vector.load %arg1[%c0_19, %c0_20, %c0_21] : memref<1x16x256xf32, #tpu.memory_space<vmem>>, vector<1x16x241xf32>
    %43 = vector.shape_cast %42 : vector<1x16x241xf32> to vector<16x241xf32>
    %44 = vector.extract_strided_slice %16 {offsets = [0, 15], sizes = [1, 241], strides = [1, 1]} : vector<1x256xi32> to vector<1x241xi32>
    %c1_i32_22 = arith.constant 1 : i32
    %45 = vector.broadcast %c1_i32_22 : i32 to vector<1x241xi32>
    %46 = arith.addi %44, %45 : vector<1x241xi32>
    %c0_i32_23 = arith.constant 0 : i32
    %47 = vector.broadcast %c0_i32_23 : i32 to vector<1x241xi32>
    %48 = arith.cmpi sge, %46, %47 : vector<1x241xi32>
    %49 = vector.extract_strided_slice %16 {offsets = [0, 15], sizes = [1, 241], strides = [1, 1]} : vector<1x256xi32> to vector<1x241xi32>
    %c1_i32_24 = arith.constant 1 : i32
    %50 = vector.broadcast %c1_i32_24 : i32 to vector<1x241xi32>
    %51 = arith.addi %49, %50 : vector<1x241xi32>
    %c16_i32_25 = arith.constant 16 : i32
    %52 = vector.broadcast %c16_i32_25 : i32 to vector<1x241xi32>
    %53 = arith.cmpi slt, %51, %52 : vector<1x241xi32>
    %54 = arith.andi %48, %53 : vector<1x241xi1>
    %cst_26 = arith.constant 0.000000e+00 : f32
    %55 = vector.shape_cast %54 : vector<1x241xi1> to vector<1x241xi1>
    %56 = vector.broadcast %55 : vector<1x241xi1> to vector<16x241xi1>
    %57 = vector.broadcast %cst_26 : f32 to vector<16x241xf32>
    %58 = arith.select %56, %43, %57 : vector<16x241xi1>, vector<16x241xf32>
    %cst_27 = arith.constant 0.000000e+00 : f32
    %59 = vector.broadcast %cst_27 : f32 to vector<16x15xf32>
    %c32 = arith.constant 32 : index
    %c0_28 = arith.constant 0 : index
    %60 = vector.load %arg5[%c32, %c0_28] : memref<144x256xf32, #tpu.memory_space<vmem>>, vector<16x15xf32>
    tpu.vector_store %arg5[%c32, %c0_28], %59 {strides = array<i32>} : memref<144x256xf32, #tpu.memory_space<vmem>>, vector<16x15xf32>,
    %c32_29 = arith.constant 32 : index
    %c15 = arith.constant 15 : index
    %61 = vector.load %arg5[%c32_29, %c15] : memref<144x256xf32, #tpu.memory_space<vmem>>, vector<16x241xf32>
    tpu.vector_store %arg5[%c32_29, %c15], %58 {strides = array<i32>} : memref<144x256xf32, #tpu.memory_space<vmem>>, vector<16x241xf32>,
    %c0_30 = arith.constant 0 : index
    %c0_31 = arith.constant 0 : index
    %c0_32 = arith.constant 0 : index
    %62 = vector.load %arg1[%c0_30, %c0_31, %c0_32] : memref<1x16x256xf32, #tpu.memory_space<vmem>>, vector<1x16x255xf32>
    %63 = vector.shape_cast %62 : vector<1x16x255xf32> to vector<16x255xf32>
    %64 = vector.extract_strided_slice %16 {offsets = [0, 1], sizes = [1, 255], strides = [1, 1]} : vector<1x256xi32> to vector<1x255xi32>
    %c-1_i32_33 = arith.constant -1 : i32
    %65 = vector.broadcast %c-1_i32_33 : i32 to vector<1x255xi32>
    %66 = arith.addi %64, %65 : vector<1x255xi32>
    %c0_i32_34 = arith.constant 0 : i32
    %67 = vector.broadcast %c0_i32_34 : i32 to vector<1x255xi32>
    %68 = arith.cmpi sge, %66, %67 : vector<1x255xi32>
    %69 = vector.extract_strided_slice %16 {offsets = [0, 1], sizes = [1, 255], strides = [1, 1]} : vector<1x256xi32> to vector<1x255xi32>
    %c-1_i32_35 = arith.constant -1 : i32
    %70 = vector.broadcast %c-1_i32_35 : i32 to vector<1x255xi32>
    %71 = arith.addi %69, %70 : vector<1x255xi32>
    %c16_i32_36 = arith.constant 16 : i32
    %72 = vector.broadcast %c16_i32_36 : i32 to vector<1x255xi32>
    %73 = arith.cmpi slt, %71, %72 : vector<1x255xi32>
    %74 = arith.andi %68, %73 : vector<1x255xi1>
    %cst_37 = arith.constant 0.000000e+00 : f32
    %75 = vector.shape_cast %74 : vector<1x255xi1> to vector<1x255xi1>
    %76 = vector.broadcast %75 : vector<1x255xi1> to vector<16x255xi1>
    %77 = vector.broadcast %cst_37 : f32 to vector<16x255xf32>
    %78 = arith.select %76, %63, %77 : vector<16x255xi1>, vector<16x255xf32>
    %cst_38 = arith.constant 0.000000e+00 : f32
    %79 = vector.broadcast %cst_38 : f32 to vector<16x1xf32>
    %c48 = arith.constant 48 : index
    %c0_39 = arith.constant 0 : index
    %80 = vector.load %arg5[%c48, %c0_39] : memref<144x256xf32, #tpu.memory_space<vmem>>, vector<16x1xf32>
    tpu.vector_store %arg5[%c48, %c0_39], %79 {strides = array<i32>} : memref<144x256xf32, #tpu.memory_space<vmem>>, vector<16x1xf32>,
    %c48_40 = arith.constant 48 : index
    %c1 = arith.constant 1 : index
    %81 = vector.load %arg5[%c48_40, %c1] : memref<144x256xf32, #tpu.memory_space<vmem>>, vector<16x255xf32>
    tpu.vector_store %arg5[%c48_40, %c1], %78 {strides = array<i32>} : memref<144x256xf32, #tpu.memory_space<vmem>>, vector<16x255xf32>,
    %c0_41 = arith.constant 0 : index
    %c0_42 = arith.constant 0 : index
    %c0_43 = arith.constant 0 : index
    %82 = vector.load %arg1[%c0_41, %c0_42, %c0_43] : memref<1x16x256xf32, #tpu.memory_space<vmem>>, vector<1x16x256xf32>
    %83 = vector.shape_cast %82 : vector<1x16x256xf32> to vector<16x256xf32>
    %c64 = arith.constant 64 : index
    %c0_44 = arith.constant 0 : index
    %84 = vector.load %arg5[%c64, %c0_44] : memref<144x256xf32, #tpu.memory_space<vmem>>, vector<16x256xf32>
    tpu.vector_store %arg5[%c64, %c0_44], %83 {strides = array<i32>} : memref<144x256xf32, #tpu.memory_space<vmem>>, vector<16x256xf32>,
    %c0_45 = arith.constant 0 : index
    %c0_46 = arith.constant 0 : index
    %c1_47 = arith.constant 1 : index
    %85 = vector.load %arg1[%c0_45, %c0_46, %c1_47] : memref<1x16x256xf32, #tpu.memory_space<vmem>>, vector<1x16x255xf32>
    %86 = vector.shape_cast %85 : vector<1x16x255xf32> to vector<16x255xf32>
    %87 = vector.extract_strided_slice %16 {offsets = [0, 0], sizes = [1, 255], strides = [1, 1]} : vector<1x256xi32> to vector<1x255xi32>
    %c1_i32_48 = arith.constant 1 : i32
    %88 = vector.broadcast %c1_i32_48 : i32 to vector<1x255xi32>
    %89 = arith.addi %87, %88 : vector<1x255xi32>
    %c0_i32_49 = arith.constant 0 : i32
    %90 = vector.broadcast %c0_i32_49 : i32 to vector<1x255xi32>
    %91 = arith.cmpi sge, %89, %90 : vector<1x255xi32>
    %92 = vector.extract_strided_slice %16 {offsets = [0, 0], sizes = [1, 255], strides = [1, 1]} : vector<1x256xi32> to vector<1x255xi32>
    %c1_i32_50 = arith.constant 1 : i32
    %93 = vector.broadcast %c1_i32_50 : i32 to vector<1x255xi32>
    %94 = arith.addi %92, %93 : vector<1x255xi32>
    %c16_i32_51 = arith.constant 16 : i32
    %95 = vector.broadcast %c16_i32_51 : i32 to vector<1x255xi32>
    %96 = arith.cmpi slt, %94, %95 : vector<1x255xi32>
    %97 = arith.andi %91, %96 : vector<1x255xi1>
    %cst_52 = arith.constant 0.000000e+00 : f32
    %98 = vector.shape_cast %97 : vector<1x255xi1> to vector<1x255xi1>
    %99 = vector.broadcast %98 : vector<1x255xi1> to vector<16x255xi1>
    %100 = vector.broadcast %cst_52 : f32 to vector<16x255xf32>
    %101 = arith.select %99, %86, %100 : vector<16x255xi1>, vector<16x255xf32>
    %cst_53 = arith.constant 0.000000e+00 : f32
    %102 = vector.broadcast %cst_53 : f32 to vector<16x1xf32>
    %c80 = arith.constant 80 : index
    %c255 = arith.constant 255 : index
    %103 = vector.load %arg5[%c80, %c255] : memref<144x256xf32, #tpu.memory_space<vmem>>, vector<16x1xf32>
    tpu.vector_store %arg5[%c80, %c255], %102 {strides = array<i32>} : memref<144x256xf32, #tpu.memory_space<vmem>>, vector<16x1xf32>,
    %c80_54 = arith.constant 80 : index
    %c0_55 = arith.constant 0 : index
    %104 = vector.load %arg5[%c80_54, %c0_55] : memref<144x256xf32, #tpu.memory_space<vmem>>, vector<16x255xf32>
    tpu.vector_store %arg5[%c80_54, %c0_55], %101 {strides = array<i32>} : memref<144x256xf32, #tpu.memory_space<vmem>>, vector<16x255xf32>,
    %c0_56 = arith.constant 0 : index
    %c0_57 = arith.constant 0 : index
    %c15_58 = arith.constant 15 : index
    %105 = vector.load %arg1[%c0_56, %c0_57, %c15_58] : memref<1x16x256xf32, #tpu.memory_space<vmem>>, vector<1x16x241xf32>
    %106 = vector.shape_cast %105 : vector<1x16x241xf32> to vector<16x241xf32>
    %107 = vector.extract_strided_slice %16 {offsets = [0, 0], sizes = [1, 241], strides = [1, 1]} : vector<1x256xi32> to vector<1x241xi32>
    %c-1_i32_59 = arith.constant -1 : i32
    %108 = vector.broadcast %c-1_i32_59 : i32 to vector<1x241xi32>
    %109 = arith.addi %107, %108 : vector<1x241xi32>
    %c0_i32_60 = arith.constant 0 : i32
    %110 = vector.broadcast %c0_i32_60 : i32 to vector<1x241xi32>
    %111 = arith.cmpi sge, %109, %110 : vector<1x241xi32>
    %112 = vector.extract_strided_slice %16 {offsets = [0, 0], sizes = [1, 241], strides = [1, 1]} : vector<1x256xi32> to vector<1x241xi32>
    %c-1_i32_61 = arith.constant -1 : i32
    %113 = vector.broadcast %c-1_i32_61 : i32 to vector<1x241xi32>
    %114 = arith.addi %112, %113 : vector<1x241xi32>
    %c16_i32_62 = arith.constant 16 : i32
    %115 = vector.broadcast %c16_i32_62 : i32 to vector<1x241xi32>
    %116 = arith.cmpi slt, %114, %115 : vector<1x241xi32>
    %117 = arith.andi %111, %116 : vector<1x241xi1>
    %cst_63 = arith.constant 0.000000e+00 : f32
    %118 = vector.shape_cast %117 : vector<1x241xi1> to vector<1x241xi1>
    %119 = vector.broadcast %118 : vector<1x241xi1> to vector<16x241xi1>
    %120 = vector.broadcast %cst_63 : f32 to vector<16x241xf32>
    %121 = arith.select %119, %106, %120 : vector<16x241xi1>, vector<16x241xf32>
    %cst_64 = arith.constant 0.000000e+00 : f32
    %122 = vector.broadcast %cst_64 : f32 to vector<16x15xf32>
    %c96 = arith.constant 96 : index
    %c241 = arith.constant 241 : index
    %123 = vector.load %arg5[%c96, %c241] : memref<144x256xf32, #tpu.memory_space<vmem>>, vector<16x15xf32>
    tpu.vector_store %arg5[%c96, %c241], %122 {strides = array<i32>} : memref<144x256xf32, #tpu.memory_space<vmem>>, vector<16x15xf32>,
    %c96_65 = arith.constant 96 : index
    %c0_66 = arith.constant 0 : index
    %124 = vector.load %arg5[%c96_65, %c0_66] : memref<144x256xf32, #tpu.memory_space<vmem>>, vector<16x241xf32>
    tpu.vector_store %arg5[%c96_65, %c0_66], %121 {strides = array<i32>} : memref<144x256xf32, #tpu.memory_space<vmem>>, vector<16x241xf32>,
    %c0_67 = arith.constant 0 : index
    %c0_68 = arith.constant 0 : index
    %c16_69 = arith.constant 16 : index
    %125 = vector.load %arg1[%c0_67, %c0_68, %c16_69] : memref<1x16x256xf32, #tpu.memory_space<vmem>>, vector<1x16x240xf32>
    %126 = vector.shape_cast %125 : vector<1x16x240xf32> to vector<16x240xf32>
    %cst_70 = arith.constant 0.000000e+00 : f32
    %127 = vector.broadcast %cst_70 : f32 to vector<16x16xf32>
    %c112 = arith.constant 112 : index
    %c240 = arith.constant 240 : index
    %128 = vector.load %arg5[%c112, %c240] : memref<144x256xf32, #tpu.memory_space<vmem>>, vector<16x16xf32>
    tpu.vector_store %arg5[%c112, %c240], %127 {strides = array<i32>} : memref<144x256xf32, #tpu.memory_space<vmem>>, vector<16x16xf32>,
    %c112_71 = arith.constant 112 : index
    %c0_72 = arith.constant 0 : index
    %129 = vector.load %arg5[%c112_71, %c0_72] : memref<144x256xf32, #tpu.memory_space<vmem>>, vector<16x240xf32>
    tpu.vector_store %arg5[%c112_71, %c0_72], %126 {strides = array<i32>} : memref<144x256xf32, #tpu.memory_space<vmem>>, vector<16x240xf32>,
    %c0_73 = arith.constant 0 : index
    %c0_74 = arith.constant 0 : index
    %c17_75 = arith.constant 17 : index
    %130 = vector.load %arg1[%c0_73, %c0_74, %c17_75] : memref<1x16x256xf32, #tpu.memory_space<vmem>>, vector<1x16x239xf32>
    %131 = vector.shape_cast %130 : vector<1x16x239xf32> to vector<16x239xf32>
    %132 = vector.extract_strided_slice %16 {offsets = [0, 0], sizes = [1, 239], strides = [1, 1]} : vector<1x256xi32> to vector<1x239xi32>
    %c1_i32_76 = arith.constant 1 : i32
    %133 = vector.broadcast %c1_i32_76 : i32 to vector<1x239xi32>
    %134 = arith.addi %132, %133 : vector<1x239xi32>
    %c0_i32_77 = arith.constant 0 : i32
    %135 = vector.broadcast %c0_i32_77 : i32 to vector<1x239xi32>
    %136 = arith.cmpi sge, %134, %135 : vector<1x239xi32>
    %137 = vector.extract_strided_slice %16 {offsets = [0, 0], sizes = [1, 239], strides = [1, 1]} : vector<1x256xi32> to vector<1x239xi32>
    %c1_i32_78 = arith.constant 1 : i32
    %138 = vector.broadcast %c1_i32_78 : i32 to vector<1x239xi32>
    %139 = arith.addi %137, %138 : vector<1x239xi32>
    %c16_i32_79 = arith.constant 16 : i32
    %140 = vector.broadcast %c16_i32_79 : i32 to vector<1x239xi32>
    %141 = arith.cmpi slt, %139, %140 : vector<1x239xi32>
    %142 = arith.andi %136, %141 : vector<1x239xi1>
    %cst_80 = arith.constant 0.000000e+00 : f32
    %143 = vector.shape_cast %142 : vector<1x239xi1> to vector<1x239xi1>
    %144 = vector.broadcast %143 : vector<1x239xi1> to vector<16x239xi1>
    %145 = vector.broadcast %cst_80 : f32 to vector<16x239xf32>
    %146 = arith.select %144, %131, %145 : vector<16x239xi1>, vector<16x239xf32>
    %cst_81 = arith.constant 0.000000e+00 : f32
    %147 = vector.broadcast %cst_81 : f32 to vector<16x17xf32>
    %c128 = arith.constant 128 : index
    %c239 = arith.constant 239 : index
    %148 = vector.load %arg5[%c128, %c239] : memref<144x256xf32, #tpu.memory_space<vmem>>, vector<16x17xf32>
    tpu.vector_store %arg5[%c128, %c239], %147 {strides = array<i32>} : memref<144x256xf32, #tpu.memory_space<vmem>>, vector<16x17xf32>,
    %c128_82 = arith.constant 128 : index
    %c0_83 = arith.constant 0 : index
    %149 = vector.load %arg5[%c128_82, %c0_83] : memref<144x256xf32, #tpu.memory_space<vmem>>, vector<16x239xf32>
    tpu.vector_store %arg5[%c128_82, %c0_83], %146 {strides = array<i32>} : memref<144x256xf32, #tpu.memory_space<vmem>>, vector<16x239xf32>,
    %c0_84 = arith.constant 0 : index
    %c0_85 = arith.constant 0 : index
    %150 = vector.load %arg2[%c0_84, %c0_85] : memref<16x144xf32, #tpu.memory_space<vmem>>, vector<16x144xf32>
    %c0_86 = arith.constant 0 : index
    %c0_87 = arith.constant 0 : index
    %151 = vector.load %arg5[%c0_86, %c0_87] : memref<144x256xf32, #tpu.memory_space<vmem>>, vector<144x256xf32>
    %cst_88 = arith.constant dense<0.000000e+00> : vector<16x256xf32>
    %152 = tpu.matmul %150, %151, %cst_88 {dimension_numbers = #tpu.dot_dimension_numbers<[1], [0], [0], [1], [0, 0, 1, 1], [], []>} : vector<16x144xf32>, vector<144x256xf32>, vector<16x256xf32> -> vector<16x256xf32>
    %c0_89 = arith.constant 0 : index
    %c0_90 = arith.constant 0 : index
    %153 = vector.load %arg3[%c0_89, %c0_90] : memref<16x1xf32, #tpu.memory_space<vmem>>, vector<16x1xf32>
    %154 = vector.broadcast %153 : vector<16x1xf32> to vector<16x256xf32>
    %155 = arith.addf %152, %154 : vector<16x256xf32>
    %cst_91 = arith.constant 0.000000e+00 : f32
    %156 = vector.broadcast %cst_91 : f32 to vector<16x256xf32>
    %157 = arith.maximumf %155, %156 : vector<16x256xf32>
    %c0_92 = arith.constant 0 : index
    %c0_93 = arith.constant 0 : index
    %c0_94 = arith.constant 0 : index
    %158 = vector.load %arg4[%c0_92, %c0_93, %c0_94] : memref<1x16x256xf32, #tpu.memory_space<vmem>>, vector<1x16x256xf32>
    %159 = vector.shape_cast %158 : vector<1x16x256xf32> to vector<16x256xf32>
    %160 = vector.shape_cast %157 : vector<16x256xf32> to vector<1x16x256xf32>
    tpu.vector_store %arg4[%c0_92, %c0_93, %c0_94], %160 {strides = array<i32>} : memref<1x16x256xf32, #tpu.memory_space<vmem>>, vector<1x16x256xf32>,
    return
  }
  func.func @transform_0(%arg0: i32) -> (i32, i32, i32) {
    %c0_i32 = arith.constant 0 : i32
    %c0_i32_0 = arith.constant 0 : i32
    %c0_i32_1 = arith.constant 0 : i32
    return %arg0, %c0_i32, %c0_i32_0 : i32, i32, i32
  }
  func.func @transform_1(%arg0: i32) -> (i32, i32) {
    %c0_i32 = arith.constant 0 : i32
    %c0_i32_0 = arith.constant 0 : i32
    %c0_i32_1 = arith.constant 0 : i32
    return %c0_i32, %c0_i32_0 : i32, i32
  }
  func.func @transform_2(%arg0: i32) -> (i32, i32) {
    %c0_i32 = arith.constant 0 : i32
    %c0_i32_0 = arith.constant 0 : i32
    %c0_i32_1 = arith.constant 0 : i32
    return %c0_i32, %c0_i32_0 : i32, i32
  }
  func.func @transform_3(%arg0: i32) -> (i32, i32, i32) {
    %c0_i32 = arith.constant 0 : i32
    %c0_i32_0 = arith.constant 0 : i32
    %c0_i32_1 = arith.constant 0 : i32
    return %arg0, %c0_i32, %c0_i32_0 : i32, i32, i32
  }
}

</mosaic_0001>

<llo_original>
// kernel: tpu_custom_call.1
$region0: #{tpu_custom_call.1}
  #allocation0 [shape = 'u32[]', space=smem, size = 0x4, offset = 0x4, fixed_abs, tag = 'smem constant byte address 0x4 - core index']
  #allocation1 [shape = 'u32[144,128]{1,0:T(1,128)}', space=vmem, size = 0x12000, scoped, tag = 'internal scratch']
  #allocation2 [shape = 'f32[144,256]{1,0:T(8,128)}', space=vmem, size = 0x24000, scoped, tag = 'scratch operand']
  %s0 = inlined_call_operand.hbm [shape: f32[2,16,256], index: 0, kind: input, shape index: {}]
  %s1 = inlined_call_operand.hbm [shape: f32[16,144], index: 1, kind: input, shape index: {}]
  %s2 = inlined_call_operand.vmem [shape: f32[16,1], index: 2, kind: input, shape index: {}]
  %s3 = inlined_call_operand.hbm [shape: f32[2,16,256], index: 3, kind: output, shape index: {}]
  %s4 = sld [smem:[#allocation0]]
  $region53: #{tpu_custom_call.1} parent=0
    _
  %s6 = ssub.s32 1, %s4
  %s7 = scalar_select 0, %s6, %s4
  $region1: #{tpu_custom_call.1} parent=0
    #allocation3 [shape = 'u8[32768]{0}', space=vmem, size = 0x8000, scoped, tag = 'input window, operand 0']
    #allocation4 [shape = 's32[2]{0}', space=sflag, size = 0x8, scoped, tag = 'scoped memory for tpu_custom_call.1']
    #allocation5 [shape = 's32[2]{0}', space=sflag, size = 0x8, scoped, tag = 'scoped memory for tpu_custom_call.1']
    #allocation6 [shape = 'u8[16384]{0}', space=vmem, size = 0x4000, scoped, tag = 'input window, operand 1, single buffered']
    #allocation7 [shape = 's32[1]{0}', space=sflag, size = 0x4, scoped, tag = 'scoped memory for tpu_custom_call.1']
    #allocation8 [shape = 'u8[32768]{0}', space=vmem, size = 0x8000, scoped, tag = 'output window, operand 0']
    %8 = vsyncpa [#allocation4], 0
    %s9 = scalar_lea.sflag [#allocation4], 1
    %10 = vsyncpa %s9, 0
    %11 = vsyncpa [#allocation7], 0
    %12 = vsyncpa [#allocation5], 0
    %s13 = scalar_lea.sflag [#allocation5], 1
    %14 = vsyncpa %s13, 0
    loop: start=0, step=1, limit=4
    $region2: #{tpu_custom_call.1} parent=1 // loop_pre_header
      _
    $region3: #{tpu_custom_call.1} parent=1 // loop_header
      %s16 = sphi 0, %s20
      %p17 = scmp.ge.s32.totalorder %s16, 4
      %s26 = sphi 0, %s28
      %s29 = sphi 0, %s26
      %s30 = sphi 0, %s29
      %s46 = sphi 0, %s30
      %s50 = sphi 0, %s50
      %s52 = sphi 0, %s50
      %s53 = sphi 0, %s52
      %s67 = sphi 0, %s53
      %s71 = sphi 0, %s71
      %s73 = sphi 0, %s71
      %s74 = sphi 0, %s73
      %s88 = sphi 0, %s74
      %s94 = sphi 0, %s96
      %s97 = sphi 0, %s94
      %s98 = sphi 0, %s97
      %s114 = sphi 0, %s98
    $region4: #{tpu_custom_call.1} parent=1 // loop_header_branch
      %19 = sbr.rel (%p17) target = $region8
    $region5: #{tpu_custom_call.1} parent=1 // loop_body
      %s21 = ssub.s32 %s16, 1
      %s22 = ssub.s32 %s16, 2
      %s23 = sadd.s32 %s16, 1
      %s24 = ssub.s32 %s16, %s23
      %p25 = scmp.eq.s32.totalorder %s24, 0
      %s27 = sadd.s32 %s26, 1
      %s28 = scalar_select %p25, %s26, %s27
      %p31 = pneg %p25
      %p32 = scmp.eq.s32.totalorder %s16, 1
      %p33 = por %p31, %p32
      %p34 = scmp.ne.s32.totalorder %s26, %s29
      %p35 = scmp.eq.s32.totalorder %s16, 0
      %p36 = por %p34, %p35
      %p37 = scmp.ne.s32.totalorder %s26, %s29
      %p38 = scmp.eq.s32.totalorder %s21, 1
      %p39 = por %p37, %p38
      %p40 = scmp.ne.s32.totalorder %s29, %s30
      %p41 = scmp.eq.s32.totalorder %s21, 0
      %p42 = por %p40, %p41
      %p43 = scmp.ne.s32.totalorder %s29, %s30
      %p44 = scmp.eq.s32.totalorder %s22, 1
      %p45 = por %p43, %p44
      %p47 = scmp.ne.s32.totalorder %s30, %s46
      %p48 = scmp.eq.s32.totalorder %s22, 0
      %p49 = por %p47, %p48
      %s51 = sadd.s32 %s50, 1
      %p54 = scmp.eq.s32.totalorder %s16, 1
      %p55 = scmp.ne.s32.totalorder %s50, %s52
      %p56 = scmp.eq.s32.totalorder %s16, 0
      %p57 = por %p55, %p56
      %p58 = scmp.ne.s32.totalorder %s50, %s52
      %p59 = scmp.eq.s32.totalorder %s21, 1
      %p60 = por %p58, %p59
      %p61 = scmp.ne.s32.totalorder %s52, %s53
      %p62 = scmp.eq.s32.totalorder %s21, 0
      %p63 = por %p61, %p62
      %p64 = scmp.ne.s32.totalorder %s52, %s53
      %p65 = scmp.eq.s32.totalorder %s22, 1
      %p66 = por %p64, %p65
      %p68 = scmp.ne.s32.totalorder %s53, %s67
      %p69 = scmp.eq.s32.totalorder %s22, 0
      %p70 = por %p68, %p69
      %s72 = sadd.s32 %s71, 1
      %p75 = scmp.eq.s32.totalorder %s16, 1
      %p76 = scmp.ne.s32.totalorder %s71, %s73
      %p77 = scmp.eq.s32.totalorder %s16, 0
      %p78 = por %p76, %p77
      %p79 = scmp.ne.s32.totalorder %s71, %s73
      %p80 = scmp.eq.s32.totalorder %s21, 1
      %p81 = por %p79, %p80
      %p82 = scmp.ne.s32.totalorder %s73, %s74
      %p83 = scmp.eq.s32.totalorder %s21, 0
      %p84 = por %p82, %p83
      %p85 = scmp.ne.s32.totalorder %s73, %s74
      %p86 = scmp.eq.s32.totalorder %s22, 1
      %p87 = por %p85, %p86
      %p89 = scmp.ne.s32.totalorder %s74, %s88
      %p90 = scmp.eq.s32.totalorder %s22, 0
      %p91 = por %p89, %p90
      %s92 = ssub.s32 %s16, %s23
      %p93 = scmp.eq.s32.totalorder %s92, 0
      %s95 = sadd.s32 %s94, 1
      %s96 = scalar_select %p93, %s94, %s95
      %p99 = pneg %p93
      %p100 = scmp.eq.s32.totalorder %s16, 1
      %p101 = por %p99, %p100
      %p102 = scmp.ne.s32.totalorder %s94, %s97
      %p103 = scmp.eq.s32.totalorder %s16, 0
      %p104 = por %p102, %p103
      %p105 = scmp.ne.s32.totalorder %s94, %s97
      %p106 = scmp.eq.s32.totalorder %s21, 1
      %p107 = por %p105, %p106
      %p108 = scmp.ne.s32.totalorder %s97, %s98
      %p109 = scmp.eq.s32.totalorder %s21, 0
      %p110 = por %p108, %p109
      %p111 = scmp.ne.s32.totalorder %s97, %s98
      %p112 = scmp.eq.s32.totalorder %s22, 1
      %p113 = por %p111, %p112
      %p115 = scmp.ne.s32.totalorder %s98, %s114
      %p116 = scmp.eq.s32.totalorder %s22, 0
      %p117 = por %p115, %p116
      %p118 = scmp.le.s32.totalorder 1, %s16
      %p119 = scmp.lt.s32.totalorder %s16, 3
      %p120 = pnand %p118, %p119
      %p121 = pneg %p120
      // Predicated region
      $region9: #{tpu_custom_call.1} parent=5 // pred_check
        _
      $region10: #{tpu_custom_call.1} parent=5 // pred_check_branch
        %123 = sbr.rel (%p120) target = $region12
      $region11: #{tpu_custom_call.1} parent=5 // pred_region
        %s124 = ssub.s32 %s16, 1
        // Predicated region
        $region13: #{tpu_custom_call.1} parent=11 // pred_check
          %p125 = pneg %p63
        $region14: #{tpu_custom_call.1} parent=11 // pred_check_branch
          %127 = sbr.rel (%p125) target = $region16
        $region15: #{tpu_custom_call.1} parent=11 // pred_region
          %s129 = ssub.s32 512, 512
          %130 = vsyncadd [#allocation7], %s129
          %s131 = sshll.u32 [#allocation6], 4
          %s132 = int_to_ptr.vmem [resolvable:$true] %s131
          %137 = dma.hbm_to_vmem [thread:$0]  %s1, 512, %s132, [#allocation7], 256, 256, 16
        $region16: #{tpu_custom_call.1} parent=11 // pred_fallthru
          _
        // Predicated region
        $region17: #{tpu_custom_call.1} parent=11 // pred_check
          %p138 = pneg %p84
        $region18: #{tpu_custom_call.1} parent=11 // pred_check_branch
          %140 = sbr.rel (%p138) target = $region20
        $region19: #{tpu_custom_call.1} parent=11 // pred_region
          _
        $region20: #{tpu_custom_call.1} parent=11 // pred_fallthru
          _
      $region12: #{tpu_custom_call.1} parent=5 // pred_fallthru
        _
      %p141 = scmp.lt.s32.totalorder %s16, 2
      // Predicated region
      $region21: #{tpu_custom_call.1} parent=5 // pred_check
        %p142 = pneg %p141
      $region22: #{tpu_custom_call.1} parent=5 // pred_check_branch
        %144 = sbr.rel (%p142) target = $region24
      $region23: #{tpu_custom_call.1} parent=5 // pred_region
        // Predicated region
        $region25: #{tpu_custom_call.1} parent=23 // pred_check
          %p145 = pneg %p36
        $region26: #{tpu_custom_call.1} parent=23 // pred_check_branch
          %147 = sbr.rel (%p145) target = $region28
        $region27: #{tpu_custom_call.1} parent=23 // pred_region
          %s148 = sand.u32 %s26, 1
          %s149 = scalar_lea.sflag [#allocation4], %s148
          %s150 = sand.u32 %s26, 1
          %s151 = smul.addr %s150, 32
          %s152 = scalar_lea.vmem [#allocation3], %s151
          %s154 = ssub.s32 512, 512
          %155 = vsyncadd %s149, %s154
          %s156 = smul.addr %s16, 4
          %s157 = smul.addr %s156, 128
          %s158 = scalar_lea.hbm %s0, %s157
          %s159 = sshll.u32 %s152, 4
          %s160 = int_to_ptr.vmem [resolvable:$true] %s159
          %165 = dma.hbm_to_vmem [thread:$0]  %s158, 512, %s160, %s149, 256, 256, 16
        $region28: #{tpu_custom_call.1} parent=23 // pred_fallthru
          _
      $region24: #{tpu_custom_call.1} parent=5 // pred_fallthru
        _
      %p166 = scmp.le.s32.totalorder 1, %s16
      %p167 = scmp.lt.s32.totalorder %s16, 3
      %p168 = pnand %p166, %p167
      %p169 = pneg %p168
      // Predicated region
      $region29: #{tpu_custom_call.1} parent=5 // pred_check
        _
      $region30: #{tpu_custom_call.1} parent=5 // pred_check_branch
        %171 = sbr.rel (%p168) target = $region32
      $region31: #{tpu_custom_call.1} parent=5 // pred_region
        %s172 = ssub.s32 %s16, 1
        %s173 = sand.u32 %s29, 1
        %s174 = scalar_lea.sflag [#allocation4], %s173
        %s175 = sand.u32 %s29, 1
        %s176 = smul.addr %s175, 32
        %s177 = scalar_lea.vmem [#allocation3], %s176
        // Predicated region
        $region33: #{tpu_custom_call.1} parent=31 // pred_check
          %p178 = pneg %p42
        $region34: #{tpu_custom_call.1} parent=31 // pred_check_branch
          %180 = sbr.rel (%p178) target = $region36
        $region35: #{tpu_custom_call.1} parent=31 // pred_region
          %181 = dma.done %s174, 512
        $region36: #{tpu_custom_call.1} parent=31 // pred_fallthru
          _
        // Predicated region
        $region37: #{tpu_custom_call.1} parent=31 // pred_check
          %p182 = pneg %p63
        $region38: #{tpu_custom_call.1} parent=31 // pred_check_branch
          %184 = sbr.rel (%p182) target = $region40
        $region39: #{tpu_custom_call.1} parent=31 // pred_region
          %185 = dma.done [#allocation7], 512
        $region40: #{tpu_custom_call.1} parent=31 // pred_fallthru
          _
        %s186 = sand.u32 %s29, 1
        %s187 = scalar_lea.sflag [#allocation4], %s186
        %s188 = sand.u32 %s29, 1
        %s189 = smul.addr %s188, 32
        %s190 = scalar_lea.vmem [#allocation3], %s189
        %p191 = pneg %p42
        %p192 = pneg %p39
        %p193 = pneg %p63
        %p194 = pneg %p60
        %p195 = pneg %p84
        %p196 = pneg %p81
        %p197 = pneg %p110
        %p198 = pneg %p107
        %s199 = sand.u32 %s97, 1
        %s200 = scalar_lea.sflag [#allocation5], %s199
        %s201 = sand.u32 %s97, 1
        %s202 = smul.addr %s201, 32
        %s203 = scalar_lea.vmem [#allocation8], %s202
        %v204 = vlaneseq
        %v205 = vand.u32 %v204, 127
        %v206 = vadd.s32 %v205, 128
        %vm207 = vcmp.lt.s32.totalorder %v205, 0
        %v208 = vsub.s32 0, %v205
        %v209 = vsel %vm207, %v208, %v205
        %v210 = vshrl.u32 %v209, 4
        %v211 = vand.u32 %v209, 15
        %v212 = vsub.s32 0, %v211
        %v213 = vsel %vm207, %v212, %v211
        %vm214 = vcmp.lt.s32.totalorder %v206, 0
        %v215 = vsub.s32 0, %v206
        %v216 = vsel %vm214, %v215, %v206
        %v217 = vshrl.u32 %v216, 4
        %v218 = vand.u32 %v216, 15
        %v219 = vsub.s32 0, %v218
        %v220 = vsel %vm214, %v219, %v218
        %vm221 = vcmp.ne.s32.totalorder %v213, 0
        %vm222 = vcmp.ne.s32.totalorder %v220, 0
        %vm223 = vcmp.lt.s32.totalorder %v213, 0
        %vm224 = vcmp.lt.s32.totalorder %v220, 0
        %vm225 = vmand %vm223, %vm221
        %vm226 = vmand %vm224, %vm222
        %v227 = vadd.s32 %v213, 16
        %v228 = vadd.s32 %v220, 16
        %v229 = vsel %vm225, %v227, %v213
        %v230 = vsel %vm226, %v228, %v220
        %v231 = vld [vmem:[%s177] sm:$0xff]
        %v232 = vld [vmem:[%s177 + $0x8] sm:$0xff]
        %v233 = vld [vmem:[%s177 + $0x10] sm:$0xff]
        %v234 = vld [vmem:[%s177 + $0x18] sm:$0xff]
        %v235 = vadd.s32 %v229, 4294967295
        %v236 = vadd.s32 %v230, 4294967295
        %vm237 = vcmp.ge.s32.totalorder %v235, 0
        %vm238 = vcmp.ge.s32.totalorder %v236, 0
        %vm239 = vcmp.lt.s32.totalorder %v235, 16
        %vm240 = vcmp.lt.s32.totalorder %v236, 16
        %vm241 = vmand %vm237, %vm239
        %vm242 = vmand %vm238, %vm240
        %v243 = vsel %vm241, 1, 0
        %v244 = vsel %vm242, 1, 0
        %vm245 = vcmp.eq.s32.totalorder %v243, 1
        %vm246 = vcmp.eq.s32.totalorder %v244, 1
        %251 = vrot.lane.b32.xlu0 %v231, 17
        %v252 = vpop.permute.xlu0 %251
        %253 = vrot.lane.b32.xlu0 %v232, 17
        %v254 = vpop.permute.xlu0 %253
        %255 = vrot.lane.b32.xlu0 %v233, 17
        %v256 = vpop.permute.xlu0 %255
        %257 = vrot.lane.b32.xlu0 %v234, 17
        %v258 = vpop.permute.xlu0 %257
        %vm259 = vcmask 138240
        %v260 = vsel %vm259, %v252, %v254
        %v261 = vsel %vm259, %v256, %v258
        %v266 = vsel %vm245, %v252, 0.0
        %v267 = vsel %vm246, %v260, 0.0
        %v268 = vsel %vm245, %v256, 0.0
        %v269 = vsel %vm246, %v261, 0.0
        %270 = vst.msk [vmem:[#allocation2] sm:$0xff] %vm259, 0.0
        %271 = vst.msk [vmem:[#allocation2 + $0x10] sm:$0xff] %vm259, 0.0
        %vm272 = vcmask 1047688
        %273 = vst.msk [vmem:[#allocation2] sm:$0xff] %vm272, %v266
        %274 = vst [vmem:[#allocation2 + $0x8] sm:$0xff] %v267
        %275 = vst.msk [vmem:[#allocation2 + $0x10] sm:$0xff] %vm272, %v268
        %276 = vst [vmem:[#allocation2 + $0x18] sm:$0xff] %v269
        %v277 = vld [vmem:[%s177] sm:$0xff]
        %v278 = vld [vmem:[%s177 + $0x8] sm:$0xff]
        %v279 = vld [vmem:[%s177 + $0x10] sm:$0xff]
        %v280 = vld [vmem:[%s177 + $0x18] sm:$0xff]
        %vm281 = vcmask 130048
        %282 = vst.msk [vmem:[#allocation2 + $0x20] sm:$0xff] %vm281, 0.0
        %283 = vst.msk [vmem:[#allocation2 + $0x30] sm:$0xff] %vm281, 0.0
        %288 = vrot.lane.b32.xlu0 %v277, 16
        %v289 = vpop.permute.xlu0 %288
        %290 = vrot.lane.b32.xlu0 %v278, 16
        %v291 = vpop.permute.xlu0 %290
        %292 = vrot.lane.b32.xlu0 %v279, 16
        %v293 = vpop.permute.xlu0 %292
        %294 = vrot.lane.b32.xlu0 %v280, 16
        %v295 = vpop.permute.xlu0 %294
        %v296 = vsel %vm281, %v289, %v291
        %v297 = vsel %vm281, %v293, %v295
        %vm302 = vcmask 1047680
        %303 = vst.msk [vmem:[#allocation2 + $0x20] sm:$0xff] %vm302, %v289
        %304 = vst [vmem:[#allocation2 + $0x28] sm:$0xff] %v296
        %305 = vst.msk [vmem:[#allocation2 + $0x30] sm:$0xff] %vm302, %v293
        %306 = vst [vmem:[#allocation2 + $0x38] sm:$0xff] %v297
        %v307 = vld [vmem:[%s177] sm:$0xff]
        %v308 = vld [vmem:[%s177 + $0x8] sm:$0xff]
        %v309 = vld [vmem:[%s177 + $0x10] sm:$0xff]
        %v310 = vld [vmem:[%s177 + $0x18] sm:$0xff]
        %v311 = vadd.s32 %v229, 1
        %v312 = vadd.s32 %v230, 1
        %vm313 = vcmp.ge.s32.totalorder %v311, 0
        %vm314 = vcmp.ge.s32.totalorder %v312, 0
        %vm315 = vcmp.lt.s32.totalorder %v311, 16
        %vm316 = vcmp.lt.s32.totalorder %v312, 16
        %vm317 = vmand %vm313, %vm315
        %vm318 = vmand %vm314, %vm316
        %v319 = vsel %vm317, 1, 0
        %v320 = vsel %vm318, 1, 0
        %vm321 = vcmp.eq.s32.totalorder %v319, 1
        %vm322 = vcmp.eq.s32.totalorder %v320, 1
        %327 = vrot.lane.b32.xlu0 %v307, 15
        %v328 = vpop.permute.xlu0 %327
        %329 = vrot.lane.b32.xlu0 %v308, 15
        %v330 = vpop.permute.xlu0 %329
        %331 = vrot.lane.b32.xlu0 %v309, 15
        %v332 = vpop.permute.xlu0 %331
        %333 = vrot.lane.b32.xlu0 %v310, 15
        %v334 = vpop.permute.xlu0 %333
        %vm335 = vcmask 121856
        %v336 = vsel %vm335, %v328, %v330
        %v337 = vsel %vm335, %v332, %v334
        %v342 = vsel %vm321, %v328, 0.0
        %v343 = vsel %vm322, %v336, 0.0
        %v344 = vsel %vm321, %v332, 0.0
        %v345 = vsel %vm322, %v337, 0.0
        %346 = vst.msk [vmem:[#allocation2 + $0x40] sm:$0xff] %vm335, 0.0
        %347 = vst.msk [vmem:[#allocation2 + $0x50] sm:$0xff] %vm335, 0.0
        %vm348 = vcmask 1047672
        %349 = vst.msk [vmem:[#allocation2 + $0x40] sm:$0xff] %vm348, %v342
        %350 = vst [vmem:[#allocation2 + $0x48] sm:$0xff] %v343
        %351 = vst.msk [vmem:[#allocation2 + $0x50] sm:$0xff] %vm348, %v344
        %352 = vst [vmem:[#allocation2 + $0x58] sm:$0xff] %v345
        %v353 = vld [vmem:[%s177] sm:$0xff]
        %v354 = vld [vmem:[%s177 + $0x8] sm:$0xff]
        %v355 = vld [vmem:[%s177 + $0x10] sm:$0xff]
        %v356 = vld [vmem:[%s177 + $0x18] sm:$0xff]
        %361 = vrot.lane.b32.xlu0 %v353, 1
        %v362 = vpop.permute.xlu0 %361
        %363 = vrot.lane.b32.xlu0 %v354, 1
        %v364 = vpop.permute.xlu0 %363
        %365 = vrot.lane.b32.xlu0 %v355, 1
        %v366 = vpop.permute.xlu0 %365
        %367 = vrot.lane.b32.xlu0 %v356, 1
        %v368 = vpop.permute.xlu0 %367
        %vm369 = vcmask 7168
        %v370 = vsel %vm369, %v362, %v364
        %v371 = vsel %vm369, %v366, %v368
        %v376 = vsel %vm245, %v362, 0.0
        %v377 = vsel %vm246, %v370, 0.0
        %v378 = vsel %vm245, %v366, 0.0
        %v379 = vsel %vm246, %v371, 0.0
        %380 = vst.msk [vmem:[#allocation2 + $0x60] sm:$0xff] %vm369, 0.0
        %381 = vst.msk [vmem:[#allocation2 + $0x70] sm:$0xff] %vm369, 0.0
        %vm382 = vcmask 1047560
        %383 = vst.msk [vmem:[#allocation2 + $0x60] sm:$0xff] %vm382, %v376
        %384 = vst [vmem:[#allocation2 + $0x68] sm:$0xff] %v377
        %385 = vst.msk [vmem:[#allocation2 + $0x70] sm:$0xff] %vm382, %v378
        %386 = vst [vmem:[#allocation2 + $0x78] sm:$0xff] %v379
        %v387 = vld [vmem:[%s177] sm:$0xff]
        %v388 = vld [vmem:[%s177 + $0x8] sm:$0xff]
        %v389 = vld [vmem:[%s177 + $0x10] sm:$0xff]
        %v390 = vld [vmem:[%s177 + $0x18] sm:$0xff]
        %391 = vst [vmem:[#allocation2 + $0x80] sm:$0xff] %v387
        %392 = vst [vmem:[#allocation2 + $0x88] sm:$0xff] %v388
        %393 = vst [vmem:[#allocation2 + $0x90] sm:$0xff] %v389
        %394 = vst [vmem:[#allocation2 + $0x98] sm:$0xff] %v390
        %v395 = vld [vmem:[%s177] sm:$0xff]
        %v396 = vld [vmem:[%s177 + $0x8] sm:$0xff]
        %v397 = vld [vmem:[%s177 + $0x10] sm:$0xff]
        %v398 = vld [vmem:[%s177 + $0x18] sm:$0xff]
        %403 = vrot.lane.b32.xlu0 %v395, 127
        %v404 = vpop.permute.xlu0 %403
        %405 = vrot.lane.b32.xlu0 %v396, 127
        %v406 = vpop.permute.xlu0 %405
        %407 = vrot.lane.b32.xlu0 %v397, 127
        %v408 = vpop.permute.xlu0 %407
        %409 = vrot.lane.b32.xlu0 %v398, 127
        %v410 = vpop.permute.xlu0 %409
        %vm411 = vcmask 1039360
        %v412 = vsel %vm411, %v404, %v406
        %v413 = vsel %vm411, %v408, %v410
        %v418 = vsel %vm321, %v412, 0.0
        %v419 = vsel %vm322, %v406, 0.0
        %v420 = vsel %vm321, %v413, 0.0
        %v421 = vsel %vm322, %v410, 0.0
        %vm422 = vcmask 1048568
        %423 = vst.msk [vmem:[#allocation2 + $0xa8] sm:$0xff] %vm422, 0.0
        %424 = vst.msk [vmem:[#allocation2 + $0xb8] sm:$0xff] %vm422, 0.0
        %425 = vst [vmem:[#allocation2 + $0xa0] sm:$0xff] %v418
        %426 = vst.msk [vmem:[#allocation2 + $0xa8] sm:$0xff] %vm411, %v419
        %427 = vst [vmem:[#allocation2 + $0xb0] sm:$0xff] %v420
        %428 = vst.msk [vmem:[#allocation2 + $0xb8] sm:$0xff] %vm411, %v421
        %v429 = vld [vmem:[%s177] sm:$0xff]
        %v430 = vld [vmem:[%s177 + $0x8] sm:$0xff]
        %v431 = vld [vmem:[%s177 + $0x10] sm:$0xff]
        %v432 = vld [vmem:[%s177 + $0x18] sm:$0xff]
        %437 = vrot.lane.b32.xlu0 %v429, 113
        %v438 = vpop.permute.xlu0 %437
        %439 = vrot.lane.b32.xlu0 %v430, 113
        %v440 = vpop.permute.xlu0 %439
        %441 = vrot.lane.b32.xlu0 %v431, 113
        %v442 = vpop.permute.xlu0 %441
        %443 = vrot.lane.b32.xlu0 %v432, 113
        %v444 = vpop.permute.xlu0 %443
        %vm445 = vcmask 924672
        %v446 = vsel %vm445, %v438, %v440
        %v447 = vsel %vm445, %v442, %v444
        %v452 = vsel %vm245, %v446, 0.0
        %v453 = vsel %vm246, %v440, 0.0
        %v454 = vsel %vm245, %v447, 0.0
        %v455 = vsel %vm246, %v444, 0.0
        %vm456 = vcmask 1048456
        %457 = vst.msk [vmem:[#allocation2 + $0xc8] sm:$0xff] %vm456, 0.0
        %458 = vst.msk [vmem:[#allocation2 + $0xd8] sm:$0xff] %vm456, 0.0
        %459 = vst [vmem:[#allocation2 + $0xc0] sm:$0xff] %v452
        %460 = vst.msk [vmem:[#allocation2 + $0xc8] sm:$0xff] %vm445, %v453
        %461 = vst [vmem:[#allocation2 + $0xd0] sm:$0xff] %v454
        %462 = vst.msk [vmem:[#allocation2 + $0xd8] sm:$0xff] %vm445, %v455
        %v463 = vld [vmem:[%s177] sm:$0xff]
        %v464 = vld [vmem:[%s177 + $0x8] sm:$0xff]
        %v465 = vld [vmem:[%s177 + $0x10] sm:$0xff]
        %v466 = vld [vmem:[%s177 + $0x18] sm:$0xff]
        %vm467 = vcmask 1048448
        %468 = vst.msk [vmem:[#allocation2 + $0xe8] sm:$0xff] %vm467, 0.0
        %469 = vst.msk [vmem:[#allocation2 + $0xf8] sm:$0xff] %vm467, 0.0
        %474 = vrot.lane.b32.xlu0 %v463, 112
        %v475 = vpop.permute.xlu0 %474
        %476 = vrot.lane.b32.xlu0 %v464, 112
        %v477 = vpop.permute.xlu0 %476
        %478 = vrot.lane.b32.xlu0 %v465, 112
        %v479 = vpop.permute.xlu0 %478
        %480 = vrot.lane.b32.xlu0 %v466, 112
        %v481 = vpop.permute.xlu0 %480
        %vm482 = vcmask 916480
        %v483 = vsel %vm482, %v475, %v477
        %v484 = vsel %vm482, %v479, %v481
        %489 = vst [vmem:[#allocation2 + $0xe0] sm:$0xff] %v483
        %490 = vst.msk [vmem:[#allocation2 + $0xe8] sm:$0xff] %vm482, %v477
        %491 = vst [vmem:[#allocation2 + $0xf0] sm:$0xff] %v484
        %492 = vst.msk [vmem:[#allocation2 + $0xf8] sm:$0xff] %vm482, %v481
        %v493 = vld [vmem:[%s177] sm:$0xff]
        %v494 = vld [vmem:[%s177 + $0x8] sm:$0xff]
        %v495 = vld [vmem:[%s177 + $0x10] sm:$0xff]
        %v496 = vld [vmem:[%s177 + $0x18] sm:$0xff]
        %501 = vrot.lane.b32.xlu0 %v493, 111
        %v502 = vpop.permute.xlu0 %501
        %503 = vrot.lane.b32.xlu0 %v494, 111
        %v504 = vpop.permute.xlu0 %503
        %505 = vrot.lane.b32.xlu0 %v495, 111
        %v506 = vpop.permute.xlu0 %505
        %507 = vrot.lane.b32.xlu0 %v496, 111
        %v508 = vpop.permute.xlu0 %507
        %vm509 = vcmask 908288
        %v510 = vsel %vm509, %v502, %v504
        %v511 = vsel %vm509, %v506, %v508
        %v516 = vsel %vm321, %v510, 0.0
        %v517 = vsel %vm322, %v504, 0.0
        %v518 = vsel %vm321, %v511, 0.0
        %v519 = vsel %vm322, %v508, 0.0
        %vm520 = vcmask 1048440
        %521 = vst.msk [vmem:[#allocation2 + $0x108] sm:$0xff] %vm520, 0.0
        %522 = vst.msk [vmem:[#allocation2 + $0x118] sm:$0xff] %vm520, 0.0
        %523 = vst [vmem:[#allocation2 + $0x100] sm:$0xff] %v516
        %524 = vst.msk [vmem:[#allocation2 + $0x108] sm:$0xff] %vm509, %v517
        %525 = vst [vmem:[#allocation2 + $0x110] sm:$0xff] %v518
        %526 = vst.msk [vmem:[#allocation2 + $0x118] sm:$0xff] %vm509, %v519
        %v527 = vld [vmem:[#allocation6] sm:$0xff]
        %v528 = vld [vmem:[#allocation6 + $0x8] sm:$0xff]
        %v529 = vld [vmem:[#allocation6 + $0x10] sm:$0xff]
        %v530 = vld [vmem:[#allocation6 + $0x18] sm:$0xff]
        %v531 = vld [vmem:[#allocation2] sm:$0xff]
        %v532 = vld [vmem:[#allocation2 + $0x8] sm:$0xff]
        %v533 = vld [vmem:[#allocation2 + $0x10] sm:$0xff]
        %v534 = vld [vmem:[#allocation2 + $0x18] sm:$0xff]
        %v535 = vld [vmem:[#allocation2 + $0x20] sm:$0xff]
        %v536 = vld [vmem:[#allocation2 + $0x28] sm:$0xff]
        %v537 = vld [vmem:[#allocation2 + $0x30] sm:$0xff]
        %v538 = vld [vmem:[#allocation2 + $0x38] sm:$0xff]
        %v539 = vld [vmem:[#allocation2 + $0x40] sm:$0xff]
        %v540 = vld [vmem:[#allocation2 + $0x48] sm:$0xff]
        %v541 = vld [vmem:[#allocation2 + $0x50] sm:$0xff]
        %v542 = vld [vmem:[#allocation2 + $0x58] sm:$0xff]
        %v543 = vld [vmem:[#allocation2 + $0x60] sm:$0xff]
        %v544 = vld [vmem:[#allocation2 + $0x68] sm:$0xff]
        %v545 = vld [vmem:[#allocation2 + $0x70] sm:$0xff]
        %v546 = vld [vmem:[#allocation2 + $0x78] sm:$0xff]
        %v547 = vld [vmem:[#allocation2 + $0x80] sm:$0xff]
        %v548 = vld [vmem:[#allocation2 + $0x88] sm:$0xff]
        %v549 = vld [vmem:[#allocation2 + $0x90] sm:$0xff]
        %v550 = vld [vmem:[#allocation2 + $0x98] sm:$0xff]
        %v551 = vld [vmem:[#allocation2 + $0xa0] sm:$0xff]
        %v552 = vld [vmem:[#allocation2 + $0xa8] sm:$0xff]
        %v553 = vld [vmem:[#allocation2 + $0xb0] sm:$0xff]
        %v554 = vld [vmem:[#allocation2 + $0xb8] sm:$0xff]
        %v555 = vld [vmem:[#allocation2 + $0xc0] sm:$0xff]
        %v556 = vld [vmem:[#allocation2 + $0xc8] sm:$0xff]
        %v557 = vld [vmem:[#allocation2 + $0xd0] sm:$0xff]
        %v558 = vld [vmem:[#allocation2 + $0xd8] sm:$0xff]
        %v559 = vld [vmem:[#allocation2 + $0xe0] sm:$0xff]
        %v560 = vld [vmem:[#allocation2 + $0xe8] sm:$0xff]
        %v561 = vld [vmem:[#allocation2 + $0xf0] sm:$0xff]
        %v562 = vld [vmem:[#allocation2 + $0xf8] sm:$0xff]
        %v563 = vld [vmem:[#allocation2 + $0x100] sm:$0xff]
        %v564 = vld [vmem:[#allocation2 + $0x108] sm:$0xff]
        %v565 = vld [vmem:[#allocation2 + $0x110] sm:$0xff]
        %v566 = vld [vmem:[#allocation2 + $0x118] sm:$0xff]
        %v567 = vld [vmem:[%s2] sm:$0xff]
        %v568 = vld [vmem:[%s2 + $0x8] sm:$0xff]
        %570 = vset.pattern.permute.xlu0 0
        %571 = vperm.xlu0 %570, %v567
        %v572 = vpop.permute.xlu0 %571
        %575 = vset.pattern.permute.xlu0 0
        %576 = vperm.xlu0 %575, %v568
        %v577 = vpop.permute.xlu0 %576
        %v580 = vsel %vm281, %v528, 0
        %v583 = vsel %vm281, %v530, 0
        %585 = vmatprep.subr.mxu0 %v532
        %586 = vmatpush1.msra.mxu0 %v531
        %587 = vmatprep.subr.mxu0 %v534
        %588 = vmatpush1.msra.mxu0 %v533
        %589 = vmatprep.subr.mxu0 %v536
        %590 = vmatpush1.msra.mxu0 %v535
        %591 = vmatprep.subr.mxu0 %v538
        %592 = vmatpush1.msra.mxu0 %v537
        %593 = vmatprep.subr.mxu0 %v540
        %594 = vmatpush1.msra.mxu0 %v539
        %595 = vmatprep.subr.mxu0 %v542
        %596 = vmatpush1.msra.mxu0 %v541
        %597 = vmatprep.subr.mxu0 %v544
        %598 = vmatpush1.msra.mxu0 %v543
        %599 = vmatprep.subr.mxu0 %v546
        %600 = vmatpush1.msra.mxu0 %v545
        %601 = vmatprep.subr.mxu0 %v548
        %602 = vmatpush1.msra.mxu0 %v547
        %603 = vmatprep.subr.mxu0 %v550
        %604 = vmatpush1.msra.mxu0 %v549
        %605 = vmatprep.subr.mxu0 %v552
        %606 = vmatpush1.msra.mxu0 %v551
        %607 = vmatprep.subr.mxu0 %v554
        %608 = vmatpush1.msra.mxu0 %v553
        %609 = vmatprep.subr.mxu0 %v556
        %610 = vmatpush1.msra.mxu0 %v555
        %611 = vmatprep.subr.mxu0 %v558
        %612 = vmatpush1.msra.mxu0 %v557
        %613 = vmatprep.subr.mxu0 %v560
        %614 = vmatpush1.msra.mxu0 %v559
        %615 = vmatprep.subr.mxu0 %v562
        %616 = vmatpush1.msra.mxu0 %v561
        %617 = vmatprep.subr.mxu0 %v564
        %618 = vmatpush1.msra.mxu0 %v563
        %619 = vmatprep.subr.mxu0 %v566
        %620 = vmatpush1.msra.mxu0 %v565
        %621 = vmatprep.subr.mxu0 0.0
        %622 = vmatpush1.msra.mxu0 0.0
        %623 = vmatprep.subr.mxu0 0.0
        %624 = vmatpush1.msra.mxu0 0.0
        %625 = vmatprep.subr.mxu0 0.0
        %626 = vmatpush1.msra.mxu0 0.0
        %627 = vmatprep.subr.mxu0 0.0
        %628 = vmatpush1.msra.mxu0 0.0
        %629 = vmatprep.subr.mxu0 0.0
        %630 = vmatpush1.msra.mxu0 0.0
        %631 = vmatprep.subr.mxu0 0.0
        %632 = vmatpush1.msra.mxu0 0.0
        %633 = vmatprep.subr.mxu0 0.0
        %634 = vmatpush1.msra.mxu0 0.0
        %635 = vmatprep.subr.mxu0 0.0
        %636 = vmatpush1.msra.mxu0 0.0
        %637 = vmatprep.subr.mxu0 0.0
        %638 = vmatpush1.msra.mxu0 0.0
        %639 = vmatprep.subr.mxu0 0.0
        %640 = vmatpush1.msra.mxu0 0.0
        %641 = vmatprep.subr.mxu0 0.0
        %642 = vmatpush1.msra.mxu0 0.0
        %643 = vmatprep.subr.mxu0 0.0
        %644 = vmatpush1.msra.mxu0 0.0
        %645 = vmatprep.subr.mxu0 0.0
        %646 = vmatpush1.msra.mxu0 0.0
        %647 = vmatprep.subr.mxu0 0.0
        %648 = vmatpush1.msra.mxu0 0.0
        %649 = vmatprep.mubr.f32.mxu0 %v580
        %650 = vmatmul.mubr.f32.gmra.mrb[0].mxu0 %v527
        %v651 = vpop.f32.mrb[0].mxu0
        %v652 = vadd.f32 %v572, %v651
        %v653 = vpop.f32.mrb[0].mxu0
        %v654 = vadd.f32 %v572, %v653
        %655 = vmatprep.mubr.f32.mxu0 %v583
        %656 = vmatmul.mubr.f32.gmra.mrb[0].mxu0 %v529
        %v657 = vpop.f32.mrb[0].mxu0
        %v658 = vadd.f32 %v577, %v657
        %v659 = vpop.f32.mrb[0].mxu0
        %v660 = vadd.f32 %v577, %v659
        %661 = vdwg.mxu0
        %v662 = vmax.f32 %v652, 0.0
        %v663 = vmax.f32 %v654, 0.0
        %v664 = vmax.f32 %v658, 0.0
        %v665 = vmax.f32 %v660, 0.0
        %666 = vst [vmem:[%s203] sm:$0xff] %v662
        %667 = vst [vmem:[%s203 + $0x8] sm:$0xff] %v663
        %668 = vst [vmem:[%s203 + $0x10] sm:$0xff] %v664
        %669 = vst [vmem:[%s203 + $0x18] sm:$0xff] %v665
        %s670 = sand.u32 %s97, 1
        %s671 = scalar_lea.sflag [#allocation5], %s670
        %s672 = sand.u32 %s97, 1
        %s673 = smul.addr %s672, 32
        %s674 = scalar_lea.vmem [#allocation8], %s673
        // Predicated region
        $region41: #{tpu_custom_call.1} parent=31 // pred_check
          %p675 = pneg %p107
        $region42: #{tpu_custom_call.1} parent=31 // pred_check_branch
          %677 = sbr.rel (%p675) target = $region44
        $region43: #{tpu_custom_call.1} parent=31 // pred_region
          %s679 = ssub.s32 512, 512
          %680 = vsyncadd %s671, %s679
          %s681 = smul.addr %s21, 4
          %s682 = smul.addr %s681, 128
          %s683 = scalar_lea.hbm %s3, %s682
          %s684 = sshll.u32 %s674, 4
          %s685 = int_to_ptr.vmem [resolvable:$true] %s684
          %690 = dma.vmem_to_hbm [thread:$0]  %s685, 512, %s683, %s671, 256, 256, 16
        $region44: #{tpu_custom_call.1} parent=31 // pred_fallthru
          _
      $region32: #{tpu_custom_call.1} parent=5 // pred_fallthru
        _
      %p691 = scmp.le.s32.totalorder 2, %s16
      // Predicated region
      $region45: #{tpu_custom_call.1} parent=5 // pred_check
        %p692 = pneg %p691
      $region46: #{tpu_custom_call.1} parent=5 // pred_check_branch
        %694 = sbr.rel (%p692) target = $region48
      $region47: #{tpu_custom_call.1} parent=5 // pred_region
        %s695 = ssub.s32 %s16, 2
        // Predicated region
        $region49: #{tpu_custom_call.1} parent=47 // pred_check
          %p696 = pneg %p113
        $region50: #{tpu_custom_call.1} parent=47 // pred_check_branch
          %698 = sbr.rel (%p696) target = $region52
        $region51: #{tpu_custom_call.1} parent=47 // pred_region
          %s699 = sand.u32 %s98, 1
          %s700 = scalar_lea.sflag [#allocation5], %s699
          %s701 = sand.u32 %s98, 1
          %s702 = smul.addr %s701, 32
          %s703 = scalar_lea.vmem [#allocation8], %s702
          %704 = dma.done %s700, 512
        $region52: #{tpu_custom_call.1} parent=47 // pred_fallthru
          _
      $region48: #{tpu_custom_call.1} parent=5 // pred_fallthru
        _
    $region6: #{tpu_custom_call.1} parent=1 // loop_footer
      %s20 = sadd.s32 1, %s16
    $region7: #{tpu_custom_call.1} parent=1 // loop_footer_branch
      %15 = sbr.rel target = $region3
    $region8: #{tpu_custom_call.1} parent=1 // loop_exit
      _
    %705 = vsyncpa [#allocation4], 1
    %s706 = scalar_lea.sflag [#allocation4], 1
    %707 = vsyncpa %s706, 1
    %708 = vsyncpa [#allocation7], 1
    %709 = vsyncpa [#allocation5], 1
    %s710 = scalar_lea.sflag [#allocation5], 1
    %711 = vsyncpa %s710, 1

</llo_original>
